<compile_context>
chip_gen: v7x
topology: tpu7x:2x2x1
jax: 0.10.0
libtpu: 0.0.40
codegen_flags: <defaults>
</compile_context>

<pallas_src>
import functools

import jax
import jax.numpy as jnp
import numpy as np
from jax.experimental import pallas as pl
from jax.experimental.pallas import tpu as pltpu


def _round_up(x, m):
    return ((x + m - 1) // m) * m


def _mlp_kernel(n_linear, x_ref, *refs):
    """Fused MLP on one batch tile: (Linear+ReLU) x (n_linear-1), then the final fc Linear.

    refs = (w0, b0, w1, b1, ..., w_{n-1}, b_{n-1}, out_ref)
    Weights are bf16 and VMEM-resident (constant index_map); biases are f32 (1, d).
    Matmuls run on the MXU with f32 accumulation; bias-add/ReLU run in f32 on the VPU and
    the activation is re-packed to bf16 only once per layer.
    """
    out_ref = refs[-1]
    params = refs[:-1]
    h = x_ref[...]                                    # already bf16: no cast on layer 0
    for i in range(n_linear):
        w = params[2 * i][...]                        # bf16 (in_i, out_i)
        b = params[2 * i + 1][...]                    # f32  (1, out_i)
        acc = jnp.dot(h, w, preferred_element_type=jnp.float32) + b
        if i < n_linear - 1:
            h = jnp.maximum(acc, 0.0).astype(jnp.bfloat16)   # ReLU + single bf16 cast
        else:
            out_ref[...] = acc.astype(out_ref.dtype)         # fc layer: no ReLU


def prepare_dqn_params(weights, biases):
    """One-time parameter prep (call at init / checkpoint-load time, NOT per forward).

    weights[i]: (in_i, out_i) f32 (PyTorch's (out, in) transposed), biases[i]: (out_i,).
    Hidden feature dims are zero-padded to multiples of 128 (exact: padded cols/rows and
    biases are 0 and ReLU(0)=0); the network input and output dims are left unpadded so the
    x / Q-value HBM streams stay at their true widths.  Weights -> bf16, biases -> f32 (1,d).
    """
    n = len(weights)
    sizes = [weights[0].shape[0]] + [w.shape[1] for w in weights]
    sizes_p = list(sizes)
    for i in range(1, n):                       # pad hidden dims only
        sizes_p[i] = _round_up(sizes[i], 128)

    weights_p, biases_p = [], []
    for i, (w, b) in enumerate(zip(weights, biases)):
        in_p, out_p = sizes_p[i], sizes_p[i + 1]
        w_p = jnp.zeros((in_p, out_p), jnp.bfloat16)
        w_p = w_p.at[: w.shape[0], : w.shape[1]].set(w.astype(jnp.bfloat16))
        b_p = jnp.zeros((1, out_p), jnp.float32)
        b_p = b_p.at[0, : b.shape[0]].set(b.astype(jnp.float32))
        weights_p.append(w_p)
        biases_p.append(b_p)
    return tuple(weights_p), tuple(biases_p)


def _batch_dim_semantics():
    """CORE_PARALLEL on v7x (2 TensorCores/chip); plain 'parallel' on v5e/v6e."""
    try:
        kind = jax.devices()[0].device_kind.lower()
        if "v7" in kind and hasattr(pltpu, "CORE_PARALLEL"):
            return (pltpu.CORE_PARALLEL,)
    except Exception:
        pass
    return ("parallel",)


@functools.partial(jax.jit, static_argnames=("tile_b",))
def dqn_forward_pallas(x, weights_p, biases_p, *, tile_b=1024):
    """x: [B, in_dim] f32.  weights_p / biases_p: output of prepare_dqn_params()."""
    n_linear = len(weights_p)
    B, in_dim = x.shape
    assert in_dim == weights_p[0].shape[0], "x feature dim must match first layer"
    out_dim = weights_p[-1].shape[1]

    # Batch tiling: large tiles (multiple of 128 in M) to fill the MXU and amortise the
    # ~0.35us per-grid-step overhead; never below 16 rows (bf16 sublane packing).
    tile_b = max(16, min(tile_b, _round_up(B, 128)))
    b_pad = _round_up(B, tile_b)

    # Only the batch dim is padded in HBM; feature dims keep their true widths.
    x_bf = x.astype(jnp.bfloat16)
    if b_pad != B:
        x_bf = jnp.pad(x_bf, ((0, b_pad - B), (0, 0)))

    grid = (b_pad // tile_b,)

    # x / out stream per batch tile; weights & biases have constant block indices so they
    # stay VMEM-resident across the whole grid instead of being re-DMA'd every step.
    in_specs = [pl.BlockSpec((tile_b, in_dim), lambda i: (i, 0))]
    operands = [x_bf]
    for w_p, b_p in zip(weights_p, biases_p):
        in_specs.append(pl.BlockSpec(w_p.shape, lambda i: (0, 0)))
        in_specs.append(pl.BlockSpec(b_p.shape, lambda i: (0, 0)))
        operands += [w_p, b_p]
    out_specs = pl.BlockSpec((tile_b, out_dim), lambda i: (i, 0))

    # Explicit VMEM budget: double-buffered activation tiles + resident params + f32 temps.
    widths = [in_dim] + [w.shape[1] for w in weights_p]
    param_bytes = sum(int(w.size) * 2 for w in weights_p) + sum(int(b.size) * 4 for b in biases_p)
    needed = (2 * (tile_b * in_dim * 2 + tile_b * out_dim * 4 + param_bytes)
              + 4 * tile_b * max(widths) * 4)
    vmem_limit = int(min(max(needed, 32 * 1024 * 1024), 64 * 1024 * 1024))

    flops = 2 * b_pad * sum(int(w.shape[0]) * int(w.shape[1]) for w in weights_p)
    bytes_accessed = b_pad * in_dim * 2 + param_bytes + b_pad * out_dim * 4

    out = pl.pallas_call(
        functools.partial(_mlp_kernel, n_linear),
        out_shape=jax.ShapeDtypeStruct((b_pad, out_dim), jnp.float32),
        grid=grid,
        in_specs=in_specs,
        out_specs=out_specs,
        compiler_params=pltpu.CompilerParams(
            dimension_semantics=_batch_dim_semantics(),
            vmem_limit_bytes=vmem_limit,
        ),
        cost_estimate=pl.CostEstimate(
            flops=flops, transcendentals=0, bytes_accessed=bytes_accessed),
    )(*operands)

    return out[:B] if b_pad != B else out


def init_dqn_params(key, input_dim, output_dim, dims):
    """Deterministic init mimicking PyTorch Linear default (uniform +/- 1/sqrt(fan_in)).

    Returns weights stored as (in, out)  (i.e. PyTorch's (out, in) transposed), f32.
    """
    sizes = [input_dim] + list(dims) + [output_dim]
    weights, biases = [], []
    for i in range(len(sizes) - 1):
        fan_in, fan_out = sizes[i], sizes[i + 1]
        key, kw, kb = jax.random.split(key, 3)
        bound = 1.0 / np.sqrt(fan_in)
        w = jax.random.uniform(kw, (fan_in, fan_out), jnp.float32, -bound, bound)
        b = jax.random.uniform(kb, (fan_out,), jnp.float32, -bound, bound)
        weights.append(w)
        biases.append(b)
    return weights, biases


def dqn_forward_ref(x, weights, biases):
    """Pure-JAX f32 reference for correctness check."""
    h = x.astype(jnp.float32)
    n = len(weights)
    for i, (w, b) in enumerate(zip(weights, biases)):
        h = h @ w + b
        if i < n - 1:
            h = jnp.maximum(h, 0.0)
    return h


if __name__ == "__main__":
    # Small shapes consistent with the module: DQN(input_dim=16, output_dim=4, dims=[32, 32])
    B, input_dim, output_dim = 8, 16, 4
    dims = [32, 32]

    key = jax.random.PRNGKey(0)
    key, kx = jax.random.split(key)
    x = jax.random.normal(kx, (B, input_dim), jnp.float32)

    weights, biases = init_dqn_params(key, input_dim, output_dim, dims)
    # One-time parameter padding / bf16 cast, hoisted out of the forward pass.
    weights_p, biases_p = prepare_dqn_params(weights, biases)

    out = jax.block_until_ready(dqn_forward_pallas(x, weights_p, biases_p))
    assert out.shape == (B, output_dim)

    ref = dqn_forward_ref(x, weights, biases)
    # Tolerance loosened for bf16 matmul operands (f32 accumulation).
    np.testing.assert_allclose(np.asarray(out), np.asarray(ref), rtol=2e-2, atol=2e-2)

    print("KERNEL_OK")
</pallas_src>

<mosaic_0001>
module attributes {stable_mosaic.version = 11 : i64} {
  func.func @_mlp_kernel(%arg0: i32, %arg1: memref<128x16xbf16, #tpu.memory_space<vmem>>, %arg2: memref<16x128xbf16, #tpu.memory_space<vmem>>, %arg3: memref<1x128xf32, #tpu.memory_space<vmem>>, %arg4: memref<128x128xbf16, #tpu.memory_space<vmem>>, %arg5: memref<1x128xf32, #tpu.memory_space<vmem>>, %arg6: memref<128x4xbf16, #tpu.memory_space<vmem>>, %arg7: memref<1x4xf32, #tpu.memory_space<vmem>>, %arg8: memref<128x4xf32, #tpu.memory_space<vmem>>) attributes {dimension_semantics = [#tpu.dimension_semantics<parallel>], iteration_bounds = array<i64: 1>, scalar_prefetch = 0 : i64, scratch_operands = 0 : i64, tpu.core_type = #tpu.core_type<tc>, window_params = [{transform_indices = @transform_0, window_bounds = array<i64: 128, 16>}, {pipeline_mode = #tpu.pipeline_mode<synchronous>, transform_indices = @transform_1, window_bounds = array<i64: 16, 128>}, {pipeline_mode = #tpu.pipeline_mode<synchronous>, transform_indices = @transform_2, window_bounds = array<i64: 1, 128>}, {pipeline_mode = #tpu.pipeline_mode<synchronous>, transform_indices = @transform_3, window_bounds = array<i64: 128, 128>}, {pipeline_mode = #tpu.pipeline_mode<synchronous>, transform_indices = @transform_4, window_bounds = array<i64: 1, 128>}, {pipeline_mode = #tpu.pipeline_mode<synchronous>, transform_indices = @transform_5, window_bounds = array<i64: 128, 4>}, {pipeline_mode = #tpu.pipeline_mode<synchronous>, transform_indices = @transform_6, window_bounds = array<i64: 1, 4>}, {transform_indices = @transform_7, window_bounds = array<i64: 128, 4>}]} {
    %c0 = arith.constant 0 : index
    %c0_0 = arith.constant 0 : index
    %0 = vector.load %arg1[%c0, %c0_0] : memref<128x16xbf16, #tpu.memory_space<vmem>>, vector<128x16xbf16>
    %c0_1 = arith.constant 0 : index
    %c0_2 = arith.constant 0 : index
    %1 = vector.load %arg2[%c0_1, %c0_2] : memref<16x128xbf16, #tpu.memory_space<vmem>>, vector<16x128xbf16>
    %c0_3 = arith.constant 0 : index
    %c0_4 = arith.constant 0 : index
    %2 = vector.load %arg3[%c0_3, %c0_4] : memref<1x128xf32, #tpu.memory_space<vmem>>, vector<1x128xf32>
    %cst = arith.constant dense<0.000000e+00> : vector<128x128xf32>
    %3 = tpu.matmul %0, %1, %cst {dimension_numbers = #tpu.dot_dimension_numbers<[1], [0], [0], [1], [0, 0, 1, 1], [], []>} : vector<128x16xbf16>, vector<16x128xbf16>, vector<128x128xf32> -> vector<128x128xf32>
    %4 = vector.broadcast %2 : vector<1x128xf32> to vector<128x128xf32>
    %5 = arith.addf %3, %4 : vector<128x128xf32>
    %cst_5 = arith.constant 0.000000e+00 : f32
    %6 = vector.broadcast %cst_5 : f32 to vector<128x128xf32>
    %7 = arith.maximumf %5, %6 : vector<128x128xf32>
    %8 = arith.truncf %7 : vector<128x128xf32> to vector<128x128xbf16>
    %c0_6 = arith.constant 0 : index
    %c0_7 = arith.constant 0 : index
    %9 = vector.load %arg4[%c0_6, %c0_7] : memref<128x128xbf16, #tpu.memory_space<vmem>>, vector<128x128xbf16>
    %c0_8 = arith.constant 0 : index
    %c0_9 = arith.constant 0 : index
    %10 = vector.load %arg5[%c0_8, %c0_9] : memref<1x128xf32, #tpu.memory_space<vmem>>, vector<1x128xf32>
    %cst_10 = arith.constant dense<0.000000e+00> : vector<128x128xf32>
    %11 = tpu.matmul %8, %9, %cst_10 {dimension_numbers = #tpu.dot_dimension_numbers<[1], [0], [0], [1], [0, 0, 1, 1], [], []>} : vector<128x128xbf16>, vector<128x128xbf16>, vector<128x128xf32> -> vector<128x128xf32>
    %12 = vector.broadcast %10 : vector<1x128xf32> to vector<128x128xf32>
    %13 = arith.addf %11, %12 : vector<128x128xf32>
    %cst_11 = arith.constant 0.000000e+00 : f32
    %14 = vector.broadcast %cst_11 : f32 to vector<128x128xf32>
    %15 = arith.maximumf %13, %14 : vector<128x128xf32>
    %16 = arith.truncf %15 : vector<128x128xf32> to vector<128x128xbf16>
    %c0_12 = arith.constant 0 : index
    %c0_13 = arith.constant 0 : index
    %17 = vector.load %arg6[%c0_12, %c0_13] : memref<128x4xbf16, #tpu.memory_space<vmem>>, vector<128x4xbf16>
    %c0_14 = arith.constant 0 : index
    %c0_15 = arith.constant 0 : index
    %18 = vector.load %arg7[%c0_14, %c0_15] : memref<1x4xf32, #tpu.memory_space<vmem>>, vector<1x4xf32>
    %cst_16 = arith.constant dense<0.000000e+00> : vector<128x4xf32>
    %19 = tpu.matmul %16, %17, %cst_16 {dimension_numbers = #tpu.dot_dimension_numbers<[1], [0], [0], [1], [0, 0, 1, 1], [], []>} : vector<128x128xbf16>, vector<128x4xbf16>, vector<128x4xf32> -> vector<128x4xf32>
    %20 = vector.broadcast %18 : vector<1x4xf32> to vector<128x4xf32>
    %21 = arith.addf %19, %20 : vector<128x4xf32>
    %c0_17 = arith.constant 0 : index
    %c0_18 = arith.constant 0 : index
    %22 = vector.load %arg8[%c0_17, %c0_18] : memref<128x4xf32, #tpu.memory_space<vmem>>, vector<128x4xf32>
    tpu.vector_store %arg8[%c0_17, %c0_18], %21 {strides = array<i32>} : memref<128x4xf32, #tpu.memory_space<vmem>>, vector<128x4xf32>,
    return
  }
  func.func @transform_0(%arg0: i32) -> (i32, i32) {
    %c0_i32 = arith.constant 0 : i32
    %c0_i32_0 = arith.constant 0 : i32
    return %arg0, %c0_i32 : i32, i32
  }
  func.func @transform_1(%arg0: i32) -> (i32, i32) {
    %c0_i32 = arith.constant 0 : i32
    %c0_i32_0 = arith.constant 0 : i32
    %c0_i32_1 = arith.constant 0 : i32
    return %c0_i32, %c0_i32_0 : i32, i32
  }
  func.func @transform_2(%arg0: i32) -> (i32, i32) {
    %c0_i32 = arith.constant 0 : i32
    %c0_i32_0 = arith.constant 0 : i32
    %c0_i32_1 = arith.constant 0 : i32
    return %c0_i32, %c0_i32_0 : i32, i32
  }
  func.func @transform_3(%arg0: i32) -> (i32, i32) {
    %c0_i32 = arith.constant 0 : i32
    %c0_i32_0 = arith.constant 0 : i32
    %c0_i32_1 = arith.constant 0 : i32
    return %c0_i32, %c0_i32_0 : i32, i32
  }
  func.func @transform_4(%arg0: i32) -> (i32, i32) {
    %c0_i32 = arith.constant 0 : i32
    %c0_i32_0 = arith.constant 0 : i32
    %c0_i32_1 = arith.constant 0 : i32
    return %c0_i32, %c0_i32_0 : i32, i32
  }
  func.func @transform_5(%arg0: i32) -> (i32, i32) {
    %c0_i32 = arith.constant 0 : i32
    %c0_i32_0 = arith.constant 0 : i32
    %c0_i32_1 = arith.constant 0 : i32
    return %c0_i32, %c0_i32_0 : i32, i32
  }
  func.func @transform_6(%arg0: i32) -> (i32, i32) {
    %c0_i32 = arith.constant 0 : i32
    %c0_i32_0 = arith.constant 0 : i32
    %c0_i32_1 = arith.constant 0 : i32
    return %c0_i32, %c0_i32_0 : i32, i32
  }
  func.func @transform_7(%arg0: i32) -> (i32, i32) {
    %c0_i32 = arith.constant 0 : i32
    %c0_i32_0 = arith.constant 0 : i32
    return %arg0, %c0_i32 : i32, i32
  }
}

</mosaic_0001>

<llo_original>
// kernel: dqn_forward_pallas.1
$region0: #{dqn_forward_pallas.1}
  #allocation0 [shape = 'u32[]', space=smem, size = 0x4, offset = 0x4, fixed_abs, tag = 'smem constant byte address 0x4 - core index']
  #allocation1 [shape = 'u32[144,128]{1,0:T(1,128)}', space=vmem, size = 0x12000, scoped, tag = 'internal scratch']
  %s0 = inlined_call_operand.vmem [shape: bf16[128,16], index: 0, kind: input, shape index: {}]
  %s1 = inlined_call_operand.vmem [shape: bf16[16,128], index: 1, kind: input, shape index: {}]
  %s2 = inlined_call_operand.vmem [shape: f32[1,128], index: 2, kind: input, shape index: {}]
  %s3 = inlined_call_operand.vmem [shape: bf16[128,128], index: 3, kind: input, shape index: {}]
  %s4 = inlined_call_operand.vmem [shape: f32[1,128], index: 4, kind: input, shape index: {}]
  %s5 = inlined_call_operand.vmem [shape: bf16[128,4], index: 5, kind: input, shape index: {}]
  %s6 = inlined_call_operand.vmem [shape: f32[1,4], index: 6, kind: input, shape index: {}]
  %s7 = inlined_call_operand.vmem [shape: f32[128,4], index: 7, kind: output, shape index: {}]
  %s8 = sld [smem:[#allocation0]]
  $region38: #{dqn_forward_pallas.1} parent=0
    _
  %s10 = ssub.s32 1, %s8
  %s11 = scalar_select 0, %s10, %s8
  // Predicated region
  $region2: #{dqn_forward_pallas.1} parent=0 // pred_check
    _
  $region3: #{dqn_forward_pallas.1} parent=0 // pred_check_branch
    %13 = sbr.rel (0) target = $region5
  $region4: #{dqn_forward_pallas.1} parent=0 // pred_region
    _
  $region5: #{dqn_forward_pallas.1} parent=0 // pred_fallthru
    _
  // Predicated region
  $region6: #{dqn_forward_pallas.1} parent=0 // pred_check
    _
  $region7: #{dqn_forward_pallas.1} parent=0 // pred_check_branch
    %15 = sbr.rel (0) target = $region9
  $region8: #{dqn_forward_pallas.1} parent=0 // pred_region
    _
  $region9: #{dqn_forward_pallas.1} parent=0 // pred_fallthru
    _
  // Predicated region
  $region10: #{dqn_forward_pallas.1} parent=0 // pred_check
    _
  $region11: #{dqn_forward_pallas.1} parent=0 // pred_check_branch
    %17 = sbr.rel (0) target = $region13
  $region12: #{dqn_forward_pallas.1} parent=0 // pred_region
    _
  $region13: #{dqn_forward_pallas.1} parent=0 // pred_fallthru
    _
  // Predicated region
  $region14: #{dqn_forward_pallas.1} parent=0 // pred_check
    _
  $region15: #{dqn_forward_pallas.1} parent=0 // pred_check_branch
    %19 = sbr.rel (0) target = $region17
  $region16: #{dqn_forward_pallas.1} parent=0 // pred_region
    _
  $region17: #{dqn_forward_pallas.1} parent=0 // pred_fallthru
    _
  // Predicated region
  $region18: #{dqn_forward_pallas.1} parent=0 // pred_check
    _
  $region19: #{dqn_forward_pallas.1} parent=0 // pred_check_branch
    %21 = sbr.rel (0) target = $region21
  $region20: #{dqn_forward_pallas.1} parent=0 // pred_region
    _
  $region21: #{dqn_forward_pallas.1} parent=0 // pred_fallthru
    _
  // Predicated region
  $region22: #{dqn_forward_pallas.1} parent=0 // pred_check
    _
  $region23: #{dqn_forward_pallas.1} parent=0 // pred_check_branch
    %23 = sbr.rel (0) target = $region25
  $region24: #{dqn_forward_pallas.1} parent=0 // pred_region
    _
  $region25: #{dqn_forward_pallas.1} parent=0 // pred_fallthru
    _
  // Predicated region
  $region26: #{dqn_forward_pallas.1} parent=0 // pred_check
    _
  $region27: #{dqn_forward_pallas.1} parent=0 // pred_check_branch
    %25 = sbr.rel (0) target = $region29
  $region28: #{dqn_forward_pallas.1} parent=0 // pred_region
    _
  $region29: #{dqn_forward_pallas.1} parent=0 // pred_fallthru
    _
  %v27 = vld [vmem:[%s0] sm:$0xf]
  %v28 = vld [vmem:[%s0 + $0x4] sm:$0xf]
  %v29 = vld [vmem:[%s0 + $0x8] sm:$0xf]
  %v30 = vld [vmem:[%s0 + $0xc] sm:$0xf]
  %v31 = vld [vmem:[%s0 + $0x10] sm:$0xf]
  %v32 = vld [vmem:[%s0 + $0x14] sm:$0xf]
  %v33 = vld [vmem:[%s0 + $0x18] sm:$0xf]
  %v34 = vld [vmem:[%s0 + $0x1c] sm:$0xf]
  %v35 = vld [vmem:[%s0 + $0x20] sm:$0xf]
  %v36 = vld [vmem:[%s0 + $0x24] sm:$0xf]
  %v37 = vld [vmem:[%s0 + $0x28] sm:$0xf]
  %v38 = vld [vmem:[%s0 + $0x2c] sm:$0xf]
  %v39 = vld [vmem:[%s0 + $0x30] sm:$0xf]
  %v40 = vld [vmem:[%s0 + $0x34] sm:$0xf]
  %v41 = vld [vmem:[%s0 + $0x38] sm:$0xf]
  %v42 = vld [vmem:[%s0 + $0x3c] sm:$0xf]
  %v43 = vld [vmem:[%s1] sm:$0xf]
  %v44 = vld [vmem:[%s1 + $0x4] sm:$0xf]
  %v45 = vld [vmem:[%s2] sm:$0x1]
  %v47 = vlaneseq
  %v48 = vshrl.u32 %v47, 7
  %v49 = vsub.s32 0, %v48
  %v50 = vrot.slane %v45, %v49
  %v68 = vunpack.c.l.b16 %v27
  %v69 = vunpack.c.l.b16 %v28
  %v70 = vunpack.c.l.b16 %v29
  %v71 = vunpack.c.l.b16 %v30
  %v72 = vunpack.c.l.b16 %v31
  %v73 = vunpack.c.l.b16 %v32
  %v74 = vunpack.c.l.b16 %v33
  %v75 = vunpack.c.l.b16 %v34
  %v76 = vunpack.c.l.b16 %v35
  %v77 = vunpack.c.l.b16 %v36
  %v78 = vunpack.c.l.b16 %v37
  %v79 = vunpack.c.l.b16 %v38
  %v80 = vunpack.c.l.b16 %v39
  %v81 = vunpack.c.l.b16 %v40
  %v82 = vunpack.c.l.b16 %v41
  %v83 = vunpack.c.l.b16 %v42
  %v84 = vpack.c.b16 %v69, %v68
  %v85 = vpack.c.b16 %v71, %v70
  %v86 = vpack.c.b16 %v73, %v72
  %v87 = vpack.c.b16 %v75, %v74
  %v88 = vpack.c.b16 %v77, %v76
  %v89 = vpack.c.b16 %v79, %v78
  %v90 = vpack.c.b16 %v81, %v80
  %v91 = vpack.c.b16 %v83, %v82
  %v94 = vunpack.c.l.b16 %v43
  %v95 = vunpack.c.l.b16 %v44
  %v96 = vpack.c.b16 %v95, %v94
  %vm98 = vcmask 130048
  %v100 = vsel %vm98, %v84, 0
  %v103 = vsel %vm98, %v85, 0
  %v106 = vsel %vm98, %v86, 0
  %v109 = vsel %vm98, %v87, 0
  %v112 = vsel %vm98, %v88, 0
  %v115 = vsel %vm98, %v89, 0
  %v118 = vsel %vm98, %v90, 0
  %v121 = vsel %vm98, %v91, 0
  %123 = vmatprep.subr.bf16.mxu0 0
  %124 = vmatpush1.bf16.msra.mxu0 %v96
  %125 = vmatprep.subr.bf16.mxu0 0
  %126 = vmatpush1.bf16.msra.mxu0 0
  %127 = vmatprep.subr.bf16.mxu0 0
  %128 = vmatpush1.bf16.msra.mxu0 0
  %129 = vmatprep.subr.bf16.mxu0 0
  %130 = vmatpush1.bf16.msra.mxu0 0
  %131 = vmatprep.subr.bf16.mxu0 0
  %132 = vmatpush1.bf16.msra.mxu0 0
  %133 = vmatprep.subr.bf16.mxu0 0
  %134 = vmatpush1.bf16.msra.mxu0 0
  %135 = vmatprep.subr.bf16.mxu0 0
  %136 = vmatpush1.bf16.msra.mxu0 0
  %137 = vmatprep.subr.bf16.mxu0 0
  %138 = vmatpush1.bf16.msra.mxu0 0
  %139 = vmatprep.subr.bf16.mxu0 0
  %140 = vmatpush1.bf16.msra.mxu0 0
  %141 = vmatprep.subr.bf16.mxu0 0
  %142 = vmatpush1.bf16.msra.mxu0 0
  %143 = vmatprep.subr.bf16.mxu0 0
  %144 = vmatpush1.bf16.msra.mxu0 0
  %145 = vmatprep.subr.bf16.mxu0 0
  %146 = vmatpush1.bf16.msra.mxu0 0
  %147 = vmatprep.subr.bf16.mxu0 0
  %148 = vmatpush1.bf16.msra.mxu0 0
  %149 = vmatprep.subr.bf16.mxu0 0
  %150 = vmatpush1.bf16.msra.mxu0 0
  %151 = vmatprep.subr.bf16.mxu0 0
  %152 = vmatpush1.bf16.msra.mxu0 0
  %153 = vmatprep.subr.bf16.mxu0 0
  %154 = vmatpush1.bf16.msra.mxu0 0
  %155 = vmatprep.mubr.bf16.mxu0 0
  %156 = vmatmul.mubr.bf16.gmra.mrb[0].mxu0 %v100
  %v157 = vpop.f32.mrb[0].mxu0
  %v158 = vadd.f32 %v50, %v157
  %v159 = vpop.f32.mrb[0].mxu0
  %v160 = vpop.f32.mrb[0].mxu0
  %v161 = vadd.f32 %v50, %v160
  %v162 = vpop.f32.mrb[0].mxu0
  %163 = vmatprep.mubr.bf16.mxu0 0
  %164 = vmatmul.mubr.bf16.gmra.mrb[0].mxu0 %v103
  %v165 = vpop.f32.mrb[0].mxu0
  %v166 = vadd.f32 %v50, %v165
  %v167 = vpop.f32.mrb[0].mxu0
  %v168 = vpop.f32.mrb[0].mxu0
  %v169 = vadd.f32 %v50, %v168
  %v170 = vpop.f32.mrb[0].mxu0
  %171 = vmatprep.mubr.bf16.mxu0 0
  %172 = vmatmul.mubr.bf16.gmra.mrb[0].mxu0 %v106
  %v173 = vpop.f32.mrb[0].mxu0
  %v174 = vadd.f32 %v50, %v173
  %v175 = vpop.f32.mrb[0].mxu0
  %v176 = vpop.f32.mrb[0].mxu0
  %v177 = vadd.f32 %v50, %v176
  %v178 = vpop.f32.mrb[0].mxu0
  %179 = vmatprep.mubr.bf16.mxu0 0
  %180 = vmatmul.mubr.bf16.gmra.mrb[0].mxu0 %v109
  %v181 = vpop.f32.mrb[0].mxu0
  %v182 = vadd.f32 %v50, %v181
  %v183 = vpop.f32.mrb[0].mxu0
  %v184 = vpop.f32.mrb[0].mxu0
  %v185 = vadd.f32 %v50, %v184
  %v186 = vpop.f32.mrb[0].mxu0
  %187 = vmatprep.mubr.bf16.mxu0 0
  %188 = vmatmul.mubr.bf16.gmra.mrb[0].mxu0 %v112
  %v189 = vpop.f32.mrb[0].mxu0
  %v190 = vadd.f32 %v50, %v189
  %v191 = vpop.f32.mrb[0].mxu0
  %v192 = vpop.f32.mrb[0].mxu0
  %v193 = vadd.f32 %v50, %v192
  %v194 = vpop.f32.mrb[0].mxu0
  %195 = vmatprep.mubr.bf16.mxu0 0
  %196 = vmatmul.mubr.bf16.gmra.mrb[0].mxu0 %v115
  %v197 = vpop.f32.mrb[0].mxu0
  %v198 = vadd.f32 %v50, %v197
  %v199 = vpop.f32.mrb[0].mxu0
  %v200 = vpop.f32.mrb[0].mxu0
  %v201 = vadd.f32 %v50, %v200
  %v202 = vpop.f32.mrb[0].mxu0
  %203 = vmatprep.mubr.bf16.mxu0 0
  %204 = vmatmul.mubr.bf16.gmra.mrb[0].mxu0 %v118
  %v205 = vpop.f32.mrb[0].mxu0
  %v206 = vadd.f32 %v50, %v205
  %v207 = vpop.f32.mrb[0].mxu0
  %v208 = vpop.f32.mrb[0].mxu0
  %v209 = vadd.f32 %v50, %v208
  %v210 = vpop.f32.mrb[0].mxu0
  %211 = vmatprep.mubr.bf16.mxu0 0
  %212 = vmatmul.mubr.bf16.gmra.mrb[0].mxu0 %v121
  %v213 = vpop.f32.mrb[0].mxu0
  %v214 = vadd.f32 %v50, %v213
  %v215 = vpop.f32.mrb[0].mxu0
  %v216 = vpop.f32.mrb[0].mxu0
  %v217 = vadd.f32 %v50, %v216
  %v218 = vpop.f32.mrb[0].mxu0
  %219 = vdwg.mxu0
  %v220 = vmax.f32 %v158, 0.0
  %v221 = vmax.f32 %v161, 0.0
  %v222 = vmax.f32 %v166, 0.0
  %v223 = vmax.f32 %v169, 0.0
  %v224 = vmax.f32 %v174, 0.0
  %v225 = vmax.f32 %v177, 0.0
  %v226 = vmax.f32 %v182, 0.0
  %v227 = vmax.f32 %v185, 0.0
  %v228 = vmax.f32 %v190, 0.0
  %v229 = vmax.f32 %v193, 0.0
  %v230 = vmax.f32 %v198, 0.0
  %v231 = vmax.f32 %v201, 0.0
  %v232 = vmax.f32 %v206, 0.0
  %v233 = vmax.f32 %v209, 0.0
  %v234 = vmax.f32 %v214, 0.0
  %v235 = vmax.f32 %v217, 0.0
  %v236 = vpack.c.bf16 %v221, %v220
  %v237 = vpack.c.bf16 %v223, %v222
  %v238 = vpack.c.bf16 %v225, %v224
  %v239 = vpack.c.bf16 %v227, %v226
  %v240 = vpack.c.bf16 %v229, %v228
  %v241 = vpack.c.bf16 %v231, %v230
  %v242 = vpack.c.bf16 %v233, %v232
  %v243 = vpack.c.bf16 %v235, %v234
  %v244 = vld [vmem:[%s3] sm:$0xf]
  %v245 = vld [vmem:[%s3 + $0x4] sm:$0xf]
  %v246 = vld [vmem:[%s3 + $0x8] sm:$0xf]
  %v247 = vld [vmem:[%s3 + $0xc] sm:$0xf]
  %v248 = vld [vmem:[%s3 + $0x10] sm:$0xf]
  %v249 = vld [vmem:[%s3 + $0x14] sm:$0xf]
  %v250 = vld [vmem:[%s3 + $0x18] sm:$0xf]
  %v251 = vld [vmem:[%s3 + $0x1c] sm:$0xf]
  %v252 = vld [vmem:[%s3 + $0x20] sm:$0xf]
  %v253 = vld [vmem:[%s3 + $0x24] sm:$0xf]
  %v254 = vld [vmem:[%s3 + $0x28] sm:$0xf]
  %v255 = vld [vmem:[%s3 + $0x2c] sm:$0xf]
  %v256 = vld [vmem:[%s3 + $0x30] sm:$0xf]
  %v257 = vld [vmem:[%s3 + $0x34] sm:$0xf]
  %v258 = vld [vmem:[%s3 + $0x38] sm:$0xf]
  %v259 = vld [vmem:[%s3 + $0x3c] sm:$0xf]
  %v260 = vld [vmem:[%s4] sm:$0x1]
  %v262 = vlaneseq
  %v263 = vshrl.u32 %v262, 7
  %v264 = vsub.s32 0, %v263
  %v265 = vrot.slane %v260, %v264
  %v283 = vunpack.c.l.b16 %v244
  %v284 = vunpack.c.l.b16 %v245
  %v285 = vunpack.c.l.b16 %v246
  %v286 = vunpack.c.l.b16 %v247
  %v287 = vunpack.c.l.b16 %v248
  %v288 = vunpack.c.l.b16 %v249
  %v289 = vunpack.c.l.b16 %v250
  %v290 = vunpack.c.l.b16 %v251
  %v291 = vunpack.c.l.b16 %v252
  %v292 = vunpack.c.l.b16 %v253
  %v293 = vunpack.c.l.b16 %v254
  %v294 = vunpack.c.l.b16 %v255
  %v295 = vunpack.c.l.b16 %v256
  %v296 = vunpack.c.l.b16 %v257
  %v297 = vunpack.c.l.b16 %v258
  %v298 = vunpack.c.l.b16 %v259
  %v299 = vpack.c.b16 %v284, %v283
  %v300 = vpack.c.b16 %v286, %v285
  %v301 = vpack.c.b16 %v288, %v287
  %v302 = vpack.c.b16 %v290, %v289
  %v303 = vpack.c.b16 %v292, %v291
  %v304 = vpack.c.b16 %v294, %v293
  %v305 = vpack.c.b16 %v296, %v295
  %v306 = vpack.c.b16 %v298, %v297
  %315 = vmatprep.subr.bf16.mxu0 0
  %316 = vmatpush1.bf16.msra.mxu0 %v299
  %317 = vmatprep.subr.bf16.mxu0 0
  %318 = vmatpush1.bf16.msra.mxu0 %v300
  %319 = vmatprep.subr.bf16.mxu0 0
  %320 = vmatpush1.bf16.msra.mxu0 %v301
  %321 = vmatprep.subr.bf16.mxu0 0
  %322 = vmatpush1.bf16.msra.mxu0 %v302
  %323 = vmatprep.subr.bf16.mxu0 0
  %324 = vmatpush1.bf16.msra.mxu0 %v303
  %325 = vmatprep.subr.bf16.mxu0 0
  %326 = vmatpush1.bf16.msra.mxu0 %v304
  %327 = vmatprep.subr.bf16.mxu0 0
  %328 = vmatpush1.bf16.msra.mxu0 %v305
  %329 = vmatprep.subr.bf16.mxu0 0
  %330 = vmatpush1.bf16.msra.mxu0 %v306
  %331 = vmatprep.subr.bf16.mxu0 0
  %332 = vmatpush1.bf16.msra.mxu0 0
  %333 = vmatprep.subr.bf16.mxu0 0
  %334 = vmatpush1.bf16.msra.mxu0 0
  %335 = vmatprep.subr.bf16.mxu0 0
  %336 = vmatpush1.bf16.msra.mxu0 0
  %337 = vmatprep.subr.bf16.mxu0 0
  %338 = vmatpush1.bf16.msra.mxu0 0
  %339 = vmatprep.subr.bf16.mxu0 0
  %340 = vmatpush1.bf16.msra.mxu0 0
  %341 = vmatprep.subr.bf16.mxu0 0
  %342 = vmatpush1.bf16.msra.mxu0 0
  %343 = vmatprep.subr.bf16.mxu0 0
  %344 = vmatpush1.bf16.msra.mxu0 0
  %345 = vmatprep.subr.bf16.mxu0 0
  %346 = vmatpush1.bf16.msra.mxu0 0
  %347 = vmatprep.mubr.bf16.mxu0 0
  %348 = vmatmul.mubr.bf16.gmra.mrb[0].mxu0 %v236
  %v349 = vpop.f32.mrb[0].mxu0
  %v350 = vadd.f32 %v265, %v349
  %v351 = vpop.f32.mrb[0].mxu0
  %v352 = vpop.f32.mrb[0].mxu0
  %v353 = vadd.f32 %v265, %v352
  %v354 = vpop.f32.mrb[0].mxu0
  %355 = vmatprep.mubr.bf16.mxu0 0
  %356 = vmatmul.mubr.bf16.gmra.mrb[0].mxu0 %v237
  %v357 = vpop.f32.mrb[0].mxu0
  %v358 = vadd.f32 %v265, %v357
  %v359 = vpop.f32.mrb[0].mxu0
  %v360 = vpop.f32.mrb[0].mxu0
  %v361 = vadd.f32 %v265, %v360
  %v362 = vpop.f32.mrb[0].mxu0
  %363 = vmatprep.mubr.bf16.mxu0 0
  %364 = vmatmul.mubr.bf16.gmra.mrb[0].mxu0 %v238
  %v365 = vpop.f32.mrb[0].mxu0
  %v366 = vadd.f32 %v265, %v365
  %v367 = vpop.f32.mrb[0].mxu0
  %v368 = vpop.f32.mrb[0].mxu0
  %v369 = vadd.f32 %v265, %v368
  %v370 = vpop.f32.mrb[0].mxu0
  %371 = vmatprep.mubr.bf16.mxu0 0
  %372 = vmatmul.mubr.bf16.gmra.mrb[0].mxu0 %v239
  %v373 = vpop.f32.mrb[0].mxu0
  %v374 = vadd.f32 %v265, %v373
  %v375 = vpop.f32.mrb[0].mxu0
  %v376 = vpop.f32.mrb[0].mxu0
  %v377 = vadd.f32 %v265, %v376
  %v378 = vpop.f32.mrb[0].mxu0
  %379 = vmatprep.mubr.bf16.mxu0 0
  %380 = vmatmul.mubr.bf16.gmra.mrb[0].mxu0 %v240
  %v381 = vpop.f32.mrb[0].mxu0
  %v382 = vadd.f32 %v265, %v381
  %v383 = vpop.f32.mrb[0].mxu0
  %v384 = vpop.f32.mrb[0].mxu0
  %v385 = vadd.f32 %v265, %v384
  %v386 = vpop.f32.mrb[0].mxu0
  %387 = vmatprep.mubr.bf16.mxu0 0
  %388 = vmatmul.mubr.bf16.gmra.mrb[0].mxu0 %v241
  %v389 = vpop.f32.mrb[0].mxu0
  %v390 = vadd.f32 %v265, %v389
  %v391 = vpop.f32.mrb[0].mxu0
  %v392 = vpop.f32.mrb[0].mxu0
  %v393 = vadd.f32 %v265, %v392
  %v394 = vpop.f32.mrb[0].mxu0
  %395 = vmatprep.mubr.bf16.mxu0 0
  %396 = vmatmul.mubr.bf16.gmra.mrb[0].mxu0 %v242
  %v397 = vpop.f32.mrb[0].mxu0
  %v398 = vadd.f32 %v265, %v397
  %v399 = vpop.f32.mrb[0].mxu0
  %v400 = vpop.f32.mrb[0].mxu0
  %v401 = vadd.f32 %v265, %v400
  %v402 = vpop.f32.mrb[0].mxu0
  %403 = vmatprep.mubr.bf16.mxu0 0
  %404 = vmatmul.mubr.bf16.gmra.mrb[0].mxu0 %v243
  %v405 = vpop.f32.mrb[0].mxu0
  %v406 = vadd.f32 %v265, %v405
  %v407 = vpop.f32.mrb[0].mxu0
  %v408 = vpop.f32.mrb[0].mxu0
  %v409 = vadd.f32 %v265, %v408
  %v410 = vpop.f32.mrb[0].mxu0
  %411 = vdwg.mxu0
  %v412 = vmax.f32 %v350, 0.0
  %v413 = vmax.f32 %v353, 0.0
  %v414 = vmax.f32 %v358, 0.0
  %v415 = vmax.f32 %v361, 0.0
  %v416 = vmax.f32 %v366, 0.0
  %v417 = vmax.f32 %v369, 0.0
  %v418 = vmax.f32 %v374, 0.0
  %v419 = vmax.f32 %v377, 0.0
  %v420 = vmax.f32 %v382, 0.0
  %v421 = vmax.f32 %v385, 0.0
  %v422 = vmax.f32 %v390, 0.0
  %v423 = vmax.f32 %v393, 0.0
  %v424 = vmax.f32 %v398, 0.0
  %v425 = vmax.f32 %v401, 0.0
  %v426 = vmax.f32 %v406, 0.0
  %v427 = vmax.f32 %v409, 0.0
  %v428 = vpack.c.bf16 %v413, %v412
  %v429 = vpack.c.bf16 %v415, %v414
  %v430 = vpack.c.bf16 %v417, %v416
  %v431 = vpack.c.bf16 %v419, %v418
  %v432 = vpack.c.bf16 %v421, %v420
  %v433 = vpack.c.bf16 %v423, %v422
  %v434 = vpack.c.bf16 %v425, %v424
  %v435 = vpack.c.bf16 %v427, %v426
  %v436 = vld [vmem:[%s5] sm:$0xf]
  %v437 = vld [vmem:[%s5 + $0x4] sm:$0xf]
  %v438 = vld [vmem:[%s5 + $0x8] sm:$0xf]
  %v439 = vld [vmem:[%s5 + $0xc] sm:$0xf]
  %v440 = vld [vmem:[%s5 + $0x10] sm:$0xf]
  %v441 = vld [vmem:[%s5 + $0x14] sm:$0xf]
  %v442 = vld [vmem:[%s5 + $0x18] sm:$0xf]
  %v443 = vld [vmem:[%s5 + $0x1c] sm:$0xf]
  %v444 = vld [vmem:[%s5 + $0x20] sm:$0xf]
  %v445 = vld [vmem:[%s5 + $0x24] sm:$0xf]
  %v446 = vld [vmem:[%s5 + $0x28] sm:$0xf]
  %v447 = vld [vmem:[%s5 + $0x2c] sm:$0xf]
  %v448 = vld [vmem:[%s5 + $0x30] sm:$0xf]
  %v449 = vld [vmem:[%s5 + $0x34] sm:$0xf]
  %v450 = vld [vmem:[%s5 + $0x38] sm:$0xf]
  %v451 = vld [vmem:[%s5 + $0x3c] sm:$0xf]
  %v452 = vld [vmem:[%s6] sm:$0x1]
  %v454 = vlaneseq
  %v455 = vshrl.u32 %v454, 7
  %v456 = vsub.s32 0, %v455
  %v457 = vrot.slane %v452, %v456
  %v475 = vunpack.c.l.b16 %v436
  %v476 = vunpack.c.l.b16 %v437
  %v477 = vunpack.c.l.b16 %v438
  %v478 = vunpack.c.l.b16 %v439
  %v479 = vunpack.c.l.b16 %v440
  %v480 = vunpack.c.l.b16 %v441
  %v481 = vunpack.c.l.b16 %v442
  %v482 = vunpack.c.l.b16 %v443
  %v483 = vunpack.c.l.b16 %v444
  %v484 = vunpack.c.l.b16 %v445
  %v485 = vunpack.c.l.b16 %v446
  %v486 = vunpack.c.l.b16 %v447
  %v487 = vunpack.c.l.b16 %v448
  %v488 = vunpack.c.l.b16 %v449
  %v489 = vunpack.c.l.b16 %v450
  %v490 = vunpack.c.l.b16 %v451
  %v491 = vpack.c.b16 %v476, %v475
  %v492 = vpack.c.b16 %v478, %v477
  %v493 = vpack.c.b16 %v480, %v479
  %v494 = vpack.c.b16 %v482, %v481
  %v495 = vpack.c.b16 %v484, %v483
  %v496 = vpack.c.b16 %v486, %v485
  %v497 = vpack.c.b16 %v488, %v487
  %v498 = vpack.c.b16 %v490, %v489
  %507 = vmatprep.subr.bf16.mxu0 0
  %508 = vmatpush1.bf16.msra.mxu0 %v491
  %509 = vmatprep.subr.bf16.mxu0 0
  %510 = vmatpush1.bf16.msra.mxu0 %v492
  %511 = vmatprep.subr.bf16.mxu0 0
  %512 = vmatpush1.bf16.msra.mxu0 %v493
  %513 = vmatprep.subr.bf16.mxu0 0
  %514 = vmatpush1.bf16.msra.mxu0 %v494
  %515 = vmatprep.subr.bf16.mxu0 0
  %516 = vmatpush1.bf16.msra.mxu0 %v495
  %517 = vmatprep.subr.bf16.mxu0 0
  %518 = vmatpush1.bf16.msra.mxu0 %v496
  %519 = vmatprep.subr.bf16.mxu0 0
  %520 = vmatpush1.bf16.msra.mxu0 %v497
  %521 = vmatprep.subr.bf16.mxu0 0
  %522 = vmatpush1.bf16.msra.mxu0 %v498
  %523 = vmatprep.subr.bf16.mxu0 0
  %524 = vmatpush1.bf16.msra.mxu0 0
  %525 = vmatprep.subr.bf16.mxu0 0
  %526 = vmatpush1.bf16.msra.mxu0 0
  %527 = vmatprep.subr.bf16.mxu0 0
  %528 = vmatpush1.bf16.msra.mxu0 0
  %529 = vmatprep.subr.bf16.mxu0 0
  %530 = vmatpush1.bf16.msra.mxu0 0
  %531 = vmatprep.subr.bf16.mxu0 0
  %532 = vmatpush1.bf16.msra.mxu0 0
  %533 = vmatprep.subr.bf16.mxu0 0
  %534 = vmatpush1.bf16.msra.mxu0 0
  %535 = vmatprep.subr.bf16.mxu0 0
  %536 = vmatpush1.bf16.msra.mxu0 0
  %537 = vmatprep.subr.bf16.mxu0 0
  %538 = vmatpush1.bf16.msra.mxu0 0
  %539 = vmatprep.mubr.bf16.mxu0 0
  %540 = vmatmul.mubr.bf16.gmra.mrb[0].mxu0 %v428
  %v541 = vpop.f32.mrb[0].mxu0
  %v542 = vadd.f32 %v457, %v541
  %v543 = vpop.f32.mrb[0].mxu0
  %v544 = vpop.f32.mrb[0].mxu0
  %v545 = vadd.f32 %v457, %v544
  %v546 = vpop.f32.mrb[0].mxu0
  %547 = vmatprep.mubr.bf16.mxu0 0
  %548 = vmatmul.mubr.bf16.gmra.mrb[0].mxu0 %v429
  %v549 = vpop.f32.mrb[0].mxu0
  %v550 = vadd.f32 %v457, %v549
  %v551 = vpop.f32.mrb[0].mxu0
  %v552 = vpop.f32.mrb[0].mxu0
  %v553 = vadd.f32 %v457, %v552
  %v554 = vpop.f32.mrb[0].mxu0
  %555 = vmatprep.mubr.bf16.mxu0 0
  %556 = vmatmul.mubr.bf16.gmra.mrb[0].mxu0 %v430
  %v557 = vpop.f32.mrb[0].mxu0
  %v558 = vadd.f32 %v457, %v557
  %v559 = vpop.f32.mrb[0].mxu0
  %v560 = vpop.f32.mrb[0].mxu0
  %v561 = vadd.f32 %v457, %v560
  %v562 = vpop.f32.mrb[0].mxu0
  %563 = vmatprep.mubr.bf16.mxu0 0
  %564 = vmatmul.mubr.bf16.gmra.mrb[0].mxu0 %v431
  %v565 = vpop.f32.mrb[0].mxu0
  %v566 = vadd.f32 %v457, %v565
  %v567 = vpop.f32.mrb[0].mxu0
  %v568 = vpop.f32.mrb[0].mxu0
  %v569 = vadd.f32 %v457, %v568
  %v570 = vpop.f32.mrb[0].mxu0
  %571 = vmatprep.mubr.bf16.mxu0 0
  %572 = vmatmul.mubr.bf16.gmra.mrb[0].mxu0 %v432
  %v573 = vpop.f32.mrb[0].mxu0
  %v574 = vadd.f32 %v457, %v573
  %v575 = vpop.f32.mrb[0].mxu0
  %v576 = vpop.f32.mrb[0].mxu0
  %v577 = vadd.f32 %v457, %v576
  %v578 = vpop.f32.mrb[0].mxu0
  %579 = vmatprep.mubr.bf16.mxu0 0
  %580 = vmatmul.mubr.bf16.gmra.mrb[0].mxu0 %v433
  %v581 = vpop.f32.mrb[0].mxu0
  %v582 = vadd.f32 %v457, %v581
  %v583 = vpop.f32.mrb[0].mxu0
  %v584 = vpop.f32.mrb[0].mxu0
  %v585 = vadd.f32 %v457, %v584
  %v586 = vpop.f32.mrb[0].mxu0
  %587 = vmatprep.mubr.bf16.mxu0 0
  %588 = vmatmul.mubr.bf16.gmra.mrb[0].mxu0 %v434
  %v589 = vpop.f32.mrb[0].mxu0
  %v590 = vadd.f32 %v457, %v589
  %v591 = vpop.f32.mrb[0].mxu0
  %v592 = vpop.f32.mrb[0].mxu0
  %v593 = vadd.f32 %v457, %v592
  %v594 = vpop.f32.mrb[0].mxu0
  %595 = vmatprep.mubr.bf16.mxu0 0
  %596 = vmatmul.mubr.bf16.gmra.mrb[0].mxu0 %v435
  %v597 = vpop.f32.mrb[0].mxu0
  %v598 = vadd.f32 %v457, %v597
  %v599 = vpop.f32.mrb[0].mxu0
  %v600 = vpop.f32.mrb[0].mxu0
  %v601 = vadd.f32 %v457, %v600
  %v602 = vpop.f32.mrb[0].mxu0
  %603 = vdwg.mxu0
  %vm604 = vcmask 31744
  %605 = vst.msk [vmem:[%s7] sm:$0xff] %vm604, %v542
  %606 = vst.msk [vmem:[%s7 + $0x8] sm:$0xff] %vm604, %v545
  %607 = vst.msk [vmem:[%s7 + $0x10] sm:$0xff] %vm604, %v550
  %608 = vst.msk [vmem:[%s7 + $0x18] sm:$0xff] %vm604, %v553
  %609 = vst.msk [vmem:[%s7 + $0x20] sm:$0xff] %vm604, %v558
  %610 = vst.msk [vmem:[%s7 + $0x28] sm:$0xff] %vm604, %v561
  %611 = vst.msk [vmem:[%s7 + $0x30] sm:$0xff] %vm604, %v566
  %612 = vst.msk [vmem:[%s7 + $0x38] sm:$0xff] %vm604, %v569
  %613 = vst.msk [vmem:[%s7 + $0x40] sm:$0xff] %vm604, %v574
  %614 = vst.msk [vmem:[%s7 + $0x48] sm:$0xff] %vm604, %v577
  %615 = vst.msk [vmem:[%s7 + $0x50] sm:$0xff] %vm604, %v582
  %616 = vst.msk [vmem:[%s7 + $0x58] sm:$0xff] %vm604, %v585
  %617 = vst.msk [vmem:[%s7 + $0x60] sm:$0xff] %vm604, %v590
  %618 = vst.msk [vmem:[%s7 + $0x68] sm:$0xff] %vm604, %v593
  %619 = vst.msk [vmem:[%s7 + $0x70] sm:$0xff] %vm604, %v598
  %620 = vst.msk [vmem:[%s7 + $0x78] sm:$0xff] %vm604, %v601
  // Predicated region
  $region30: #{dqn_forward_pallas.1} parent=0 // pred_check
    _
  $region31: #{dqn_forward_pallas.1} parent=0 // pred_check_branch
    %622 = sbr.rel (0) target = $region33
  $region32: #{dqn_forward_pallas.1} parent=0 // pred_region
    _
  $region33: #{dqn_forward_pallas.1} parent=0 // pred_fallthru
    _
  // Predicated region
  $region34: #{dqn_forward_pallas.1} parent=0 // pred_check
    _
  $region35: #{dqn_forward_pallas.1} parent=0 // pred_check_branch
    %624 = sbr.rel (0) target = $region37
  $region36: #{dqn_forward_pallas.1} parent=0 // pred_region
    _
  $region37: #{dqn_forward_pallas.1} parent=0 // pred_fallthru
    _

</llo_original>
